<compile_context>
chip_gen: v6e
topology: v6e:2x2x1
jax: 0.10.0
libtpu: 0.0.40
codegen_flags: <defaults>
</compile_context>

<pallas_src>
import jax
import jax.numpy as jnp
from jax import lax
from jax.experimental import pallas as pl
from jax.experimental.pallas import tpu as pltpu

K = 15   # conv_1 kernel size
P = 7    # conv_1 padding ("same")


def _to_phi_psi_kernel(x_ref, m_ref, w2_ref, out_ref):
    # x_ref  : (bb, L, C)      VMEM  f1d rows for this grid step (f32)
    # m_ref  : (K*C + 1, C)    VMEM  fused conv_1 weights, last row = b1 (bf16)
    # w2_ref : (C + 1, 4)      VMEM  fused conv_2 weights, last row = b2 (bf16)
    # out_ref: (2, bb*L)       VMEM  lane-dense output slab (f32)
    bb, L, C = x_ref.shape
    bf16 = jnp.bfloat16

    x = x_ref[...].astype(bf16)                                   # (bb, L, C)

    # conv_1 as ONE MXU push.  Zero-pad along the sequence axis and take the
    # K shifted views (the pad rows implement the seq-direction zero padding;
    # the band structure of m_ref implements the channel-direction padding).
    # The slices/concats land on copy/XLU slots, not the MXU.
    zpad = jnp.zeros((bb, P, C), bf16)
    xp = jnp.concatenate([zpad, x, zpad], axis=1)                 # (bb, L+2P, C)
    cols = [xp[:, kw:kw + L, :] for kw in range(K)]
    cols.append(jnp.ones((bb, L, 1), bf16))                       # b1 is folded into m_ref
    zw = jnp.concatenate(cols, axis=-1).reshape(bb * L, K * C + 1)

    acc = jnp.dot(zw, m_ref[...], preferred_element_type=jnp.float32)   # (bb*L, C)

    # ELU (alpha=1).  exp(x)-1 matches the reference; |error vs expm1| < 1e-7
    # here (f32, x<=0), far below tolerance, and exp is guaranteed to lower.
    elu = jnp.where(acc > 0, acc, jnp.exp(acc) - 1.0)

    # conv_2: both kw taps + bias in one (bb*L, C+1) @ (C+1, 4) MXU push.
    elu_b = jnp.concatenate(
        [elu.astype(bf16), jnp.ones((bb * L, 1), bf16)], axis=-1)
    d = jnp.dot(elu_b, w2_ref[...], preferred_element_type=jnp.float32)  # (bb*L, 4)

    # kw=1 tap needs row l+1: shift-up-by-one (no (L,L) shift matrix, no MXU).
    # The wrapped value only lands in per-batch row L-1, which the wrapper's
    # [:, :, :L-1] slice discards.
    d0 = d[:, 0:2]
    d1 = d[:, 2:4]
    d1_up = jnp.concatenate([d1[1:, :], d1[:1, :]], axis=0)
    out_rows = d0 + d1_up                                         # (bb*L, 2)

    # Lane-dense store: (2, bb*L) -> unmasked vst instead of 2-lane masked stores.
    out_ref[...] = out_rows.T.astype(out_ref.dtype)


def to_phi_psi_forward(f1d, w1, b1, w2, b2):
    """f1d: (B, L, C) float32 -> (B, 2, L-1) float32 (PyTorch to_phi_psi.forward)."""
    B, L, C = f1d.shape
    f32, bf16 = jnp.float32, jnp.bfloat16

    # ---- conv_1 weights as a single (K*C + 1, C) matmul operand -------------
    # m_big[kw*C + c_in, c_out] = w1[0, 0, c_in - c_out + P, kw]  (0 outside band)
    # Band truncation realises the channel-direction zero padding; the trailing
    # row carries b1 (matched by the ones column in the im2col slab).
    w1s = w1[0, 0].astype(f32)                                    # (K, K) [kh, kw]
    cin = jnp.arange(C)[:, None]
    cout = jnp.arange(C)[None, :]
    kh = cin - cout + P                                           # (C, C)
    valid = (kh >= 0) & (kh < K)
    m_ck = jnp.where(valid[:, :, None],
                     w1s[jnp.clip(kh, 0, K - 1), :], 0.0)         # (C_in, C_out, K)
    m_big = jnp.transpose(m_ck, (2, 0, 1)).reshape(K * C, C)      # (K*C, C)
    m_big = jnp.concatenate([m_big, jnp.full((1, C), b1[0], f32)], axis=0)
    m_big = m_big.astype(bf16)                                    # bf16 MXU operand

    # ---- conv_2 weights: both kw taps + bias in one (C+1, 4) operand --------
    # w2cat[c, 2*kw + oc] = w2[oc, 0, c, kw]; last row = [b2_0, b2_1, 0, 0]
    # (bias attached to the kw=0 half so it is added exactly once).
    w2cat = jnp.transpose(w2[:, 0, :, :], (1, 2, 0)).reshape(C, 4).astype(f32)
    b2row = jnp.concatenate([b2.astype(f32), jnp.zeros((2,), f32)]).reshape(1, 4)
    w2cat = jnp.concatenate([w2cat, b2row], axis=0).astype(bf16)  # (C+1, 4)

    # ---- batch folding / grid ------------------------------------------------
    # Fold batches into matmul rows (amortize per-step overhead, raise MXU M
    # occupancy).  Keep a "parallel" grid only when each step still gets >=256
    # rows (so v7x's two TensorCores each take blocks); at B=2, L=16 this
    # collapses to a single grid step as recommended.
    bb = B
    for d in range(1, B + 1):
        if B % d == 0 and d * L >= 256:
            bb = d
            break
    nsteps = B // bb
    if nsteps > 1 and (bb * L) % 128 != 0:
        bb, nsteps = B, 1   # keep output store blocks lane-aligned

    out_lanes = pl.pallas_call(
        _to_phi_psi_kernel,
        out_shape=jax.ShapeDtypeStruct((2, B * L), jnp.float32),
        grid_spec=pltpu.PrefetchScalarGridSpec(
            num_scalar_prefetch=0,
            grid=(nsteps,),
            in_specs=[
                pl.BlockSpec((bb, L, C), lambda i: (i, 0, 0)),     # f1d rows
                # Constant index_maps -> weights are DMA'd once.  At the
                # production channel=1024 these are ~30 MiB in bf16: add
                # pipeline_mode=pl.Buffered(1) there to single-buffer them
                # and stay inside v7x's 64 MiB VMEM.
                pl.BlockSpec((K * C + 1, C), lambda i: (0, 0)),    # conv_1 weights (+b1)
                pl.BlockSpec((C + 1, 4), lambda i: (0, 0)),        # conv_2 weights (+b2)
            ],
            out_specs=pl.BlockSpec((2, bb * L), lambda i: (0, i)),
        ),
        compiler_params=pltpu.CompilerParams(
            dimension_semantics=("parallel",)),
    )(f1d.astype(f32), m_big, w2cat)

    # Tiny output fix-up on the (2, B*L) slab (C/2 x smaller than the input):
    # (2, B*L) -> (B, 2, L) -> drop the last (invalid) sequence column.
    out = jnp.transpose(out_lanes.reshape(2, B, L), (1, 0, 2))
    return out[:, :, : L - 1]


def _reference(f1d, w1, b1, w2, b2):
    """Pure-JAX reference matching the PyTorch module."""
    x = jnp.transpose(f1d, (0, 2, 1))[:, None, :, :]              # (B,1,C,L)
    y = lax.conv_general_dilated(
        x, w1, window_strides=(1, 1), padding=((P, P), (P, P)),
        dimension_numbers=('NCHW', 'OIHW', 'NCHW'),
        precision=lax.Precision.HIGHEST) + b1.reshape(1, 1, 1, 1)
    y = jnp.where(y > 0, y, jnp.exp(y) - 1.0)
    z = lax.conv_general_dilated(
        y, w2, window_strides=(1, 1), padding='VALID',
        dimension_numbers=('NCHW', 'OIHW', 'NCHW'),
        precision=lax.Precision.HIGHEST) + b2.reshape(1, 2, 1, 1)
    return z[:, :, 0, :]                                          # (B, 2, L-1)


if __name__ == "__main__":
    B, L, C = 2, 16, 32   # small shapes: channel=32, seq len=16

    key = jax.random.PRNGKey(0)
    k1, k2, k3, k4, k5 = jax.random.split(key, 5)
    # Deterministic synthetic parameters (shapes from the module __init__).
    w1 = jax.random.normal(k1, (1, 1, K, K), jnp.float32) * 0.05   # conv_1 weight
    b1 = jax.random.normal(k2, (1,), jnp.float32) * 0.05           # conv_1 bias
    w2 = jax.random.normal(k3, (2, 1, C, 2), jnp.float32) * 0.05   # conv_2 weight
    b2 = jax.random.normal(k4, (2,), jnp.float32) * 0.05           # conv_2 bias
    f1d = jax.random.normal(k5, (B, L, C), jnp.float32)

    out = jax.block_until_ready(to_phi_psi_forward(f1d, w1, b1, w2, b2))
    ref = _reference(f1d, w1, b1, w2, b2)

    assert out.shape == (B, 2, L - 1), out.shape
    # bf16 MXU operands (weights + activations) give ~1e-3 worst-case error at
    # these scales; budget 1e-2 (f32 accumulation via preferred_element_type).
    max_err = float(jnp.max(jnp.abs(out - ref)))
    assert bool(jnp.allclose(out, ref, rtol=1e-2, atol=1e-2)), max_err

    print("KERNEL_OK")
</pallas_src>

<mosaic_0001>
module attributes {stable_mosaic.version = 11 : i64} {
  func.func @_to_phi_psi_kernel(%arg0: i32, %arg1: memref<2x16x32xf32, #tpu.memory_space<vmem>>, %arg2: memref<481x32xbf16, #tpu.memory_space<vmem>>, %arg3: memref<33x4xbf16, #tpu.memory_space<vmem>>, %arg4: memref<2x32xf32, #tpu.memory_space<vmem>>) attributes {dimension_semantics = [#tpu.dimension_semantics<parallel>], iteration_bounds = array<i64: 1>, scalar_prefetch = 0 : i64, scratch_operands = 0 : i64, tpu.core_type = #tpu.core_type<tc>, window_params = [{transform_indices = @transform_0, window_bounds = array<i64: 2, 16, 32>}, {pipeline_mode = #tpu.pipeline_mode<synchronous>, transform_indices = @transform_1, window_bounds = array<i64: 481, 32>}, {pipeline_mode = #tpu.pipeline_mode<synchronous>, transform_indices = @transform_2, window_bounds = array<i64: 33, 4>}, {transform_indices = @transform_3, window_bounds = array<i64: 2, 32>}]} {
    %c0 = arith.constant 0 : index
    %c0_0 = arith.constant 0 : index
    %c0_1 = arith.constant 0 : index
    %0 = vector.load %arg1[%c0, %c0_0, %c0_1] : memref<2x16x32xf32, #tpu.memory_space<vmem>>, vector<2x16x32xf32>
    %1 = arith.truncf %0 : vector<2x16x32xf32> to vector<2x16x32xbf16>
    %cst = arith.constant 0.000000e+00 : bf16
    %2 = vector.broadcast %cst : bf16 to vector<2x7x32xbf16>
    %3 = tpu.concatenate %2, %1, %2 in 1 : vector<2x7x32xbf16>, vector<2x16x32xbf16>, vector<2x7x32xbf16> -> vector<2x30x32xbf16>
    %4 = vector.extract_strided_slice %3 {offsets = [0, 0, 0], sizes = [2, 16, 32], strides = [1, 1, 1]} : vector<2x30x32xbf16> to vector<2x16x32xbf16>
    %5 = vector.extract_strided_slice %3 {offsets = [0, 1, 0], sizes = [2, 16, 32], strides = [1, 1, 1]} : vector<2x30x32xbf16> to vector<2x16x32xbf16>
    %6 = vector.extract_strided_slice %3 {offsets = [0, 2, 0], sizes = [2, 16, 32], strides = [1, 1, 1]} : vector<2x30x32xbf16> to vector<2x16x32xbf16>
    %7 = vector.extract_strided_slice %3 {offsets = [0, 3, 0], sizes = [2, 16, 32], strides = [1, 1, 1]} : vector<2x30x32xbf16> to vector<2x16x32xbf16>
    %8 = vector.extract_strided_slice %3 {offsets = [0, 4, 0], sizes = [2, 16, 32], strides = [1, 1, 1]} : vector<2x30x32xbf16> to vector<2x16x32xbf16>
    %9 = vector.extract_strided_slice %3 {offsets = [0, 5, 0], sizes = [2, 16, 32], strides = [1, 1, 1]} : vector<2x30x32xbf16> to vector<2x16x32xbf16>
    %10 = vector.extract_strided_slice %3 {offsets = [0, 6, 0], sizes = [2, 16, 32], strides = [1, 1, 1]} : vector<2x30x32xbf16> to vector<2x16x32xbf16>
    %11 = vector.extract_strided_slice %3 {offsets = [0, 7, 0], sizes = [2, 16, 32], strides = [1, 1, 1]} : vector<2x30x32xbf16> to vector<2x16x32xbf16>
    %12 = vector.extract_strided_slice %3 {offsets = [0, 8, 0], sizes = [2, 16, 32], strides = [1, 1, 1]} : vector<2x30x32xbf16> to vector<2x16x32xbf16>
    %13 = vector.extract_strided_slice %3 {offsets = [0, 9, 0], sizes = [2, 16, 32], strides = [1, 1, 1]} : vector<2x30x32xbf16> to vector<2x16x32xbf16>
    %14 = vector.extract_strided_slice %3 {offsets = [0, 10, 0], sizes = [2, 16, 32], strides = [1, 1, 1]} : vector<2x30x32xbf16> to vector<2x16x32xbf16>
    %15 = vector.extract_strided_slice %3 {offsets = [0, 11, 0], sizes = [2, 16, 32], strides = [1, 1, 1]} : vector<2x30x32xbf16> to vector<2x16x32xbf16>
    %16 = vector.extract_strided_slice %3 {offsets = [0, 12, 0], sizes = [2, 16, 32], strides = [1, 1, 1]} : vector<2x30x32xbf16> to vector<2x16x32xbf16>
    %17 = vector.extract_strided_slice %3 {offsets = [0, 13, 0], sizes = [2, 16, 32], strides = [1, 1, 1]} : vector<2x30x32xbf16> to vector<2x16x32xbf16>
    %18 = vector.extract_strided_slice %3 {offsets = [0, 14, 0], sizes = [2, 16, 32], strides = [1, 1, 1]} : vector<2x30x32xbf16> to vector<2x16x32xbf16>
    %cst_2 = arith.constant 1.000000e+00 : bf16
    %19 = vector.broadcast %cst_2 : bf16 to vector<2x16x1xbf16>
    %20 = tpu.concatenate %4, %5, %6, %7, %8, %9, %10, %11, %12, %13, %14, %15, %16, %17, %18, %19 in 2 : vector<2x16x32xbf16>, vector<2x16x32xbf16>, vector<2x16x32xbf16>, vector<2x16x32xbf16>, vector<2x16x32xbf16>, vector<2x16x32xbf16>, vector<2x16x32xbf16>, vector<2x16x32xbf16>, vector<2x16x32xbf16>, vector<2x16x32xbf16>, vector<2x16x32xbf16>, vector<2x16x32xbf16>, vector<2x16x32xbf16>, vector<2x16x32xbf16>, vector<2x16x32xbf16>, vector<2x16x1xbf16> -> vector<2x16x481xbf16>
    %21 = vector.shape_cast %20 : vector<2x16x481xbf16> to vector<32x481xbf16>
    %c0_3 = arith.constant 0 : index
    %c0_4 = arith.constant 0 : index
    %22 = vector.load %arg2[%c0_3, %c0_4] : memref<481x32xbf16, #tpu.memory_space<vmem>>, vector<481x32xbf16>
    %cst_5 = arith.constant dense<0.000000e+00> : vector<32x32xf32>
    %23 = tpu.matmul %21, %22, %cst_5 {dimension_numbers = #tpu.dot_dimension_numbers<[1], [0], [0], [1], [0, 0, 1, 1], [], []>} : vector<32x481xbf16>, vector<481x32xbf16>, vector<32x32xf32> -> vector<32x32xf32>
    %cst_6 = arith.constant 0.000000e+00 : f32
    %24 = vector.broadcast %cst_6 : f32 to vector<32x32xf32>
    %25 = arith.cmpf ogt, %23, %24 : vector<32x32xf32>
    %26 = math.exp %23 : vector<32x32xf32>
    %cst_7 = arith.constant 1.000000e+00 : f32
    %27 = vector.broadcast %cst_7 : f32 to vector<32x32xf32>
    %28 = arith.subf %26, %27 : vector<32x32xf32>
    %29 = arith.select %25, %23, %28 : vector<32x32xi1>, vector<32x32xf32>
    %30 = arith.truncf %29 : vector<32x32xf32> to vector<32x32xbf16>
    %cst_8 = arith.constant 1.000000e+00 : bf16
    %31 = vector.broadcast %cst_8 : bf16 to vector<32x1xbf16>
    %32 = tpu.concatenate %30, %31 in 1 : vector<32x32xbf16>, vector<32x1xbf16> -> vector<32x33xbf16>
    %c0_9 = arith.constant 0 : index
    %c0_10 = arith.constant 0 : index
    %33 = vector.load %arg3[%c0_9, %c0_10] : memref<33x4xbf16, #tpu.memory_space<vmem>>, vector<33x4xbf16>
    %cst_11 = arith.constant dense<0.000000e+00> : vector<32x4xf32>
    %34 = tpu.matmul %32, %33, %cst_11 {dimension_numbers = #tpu.dot_dimension_numbers<[1], [0], [0], [1], [0, 0, 1, 1], [], []>} : vector<32x33xbf16>, vector<33x4xbf16>, vector<32x4xf32> -> vector<32x4xf32>
    %35 = vector.extract_strided_slice %34 {offsets = [0, 0], sizes = [32, 2], strides = [1, 1]} : vector<32x4xf32> to vector<32x2xf32>
    %36 = vector.extract_strided_slice %34 {offsets = [0, 2], sizes = [32, 2], strides = [1, 1]} : vector<32x4xf32> to vector<32x2xf32>
    %37 = vector.extract_strided_slice %36 {offsets = [1, 0], sizes = [31, 2], strides = [1, 1]} : vector<32x2xf32> to vector<31x2xf32>
    %38 = vector.extract_strided_slice %36 {offsets = [0, 0], sizes = [1, 2], strides = [1, 1]} : vector<32x2xf32> to vector<1x2xf32>
    %39 = tpu.concatenate %37, %38 in 0 : vector<31x2xf32>, vector<1x2xf32> -> vector<32x2xf32>
    %40 = arith.addf %35, %39 : vector<32x2xf32>
    %41 = tpu.transpose %40, [1, 0] : vector<32x2xf32> -> vector<2x32xf32>
    %c0_12 = arith.constant 0 : index
    %c0_13 = arith.constant 0 : index
    %42 = vector.load %arg4[%c0_12, %c0_13] : memref<2x32xf32, #tpu.memory_space<vmem>>, vector<2x32xf32>
    tpu.vector_store %arg4[%c0_12, %c0_13], %41 {strides = array<i32>} : memref<2x32xf32, #tpu.memory_space<vmem>>, vector<2x32xf32>,
    return
  }
  func.func @transform_0(%arg0: i32) -> (i32, i32, i32) {
    %c0_i32 = arith.constant 0 : i32
    %c0_i32_0 = arith.constant 0 : i32
    %c0_i32_1 = arith.constant 0 : i32
    return %arg0, %c0_i32, %c0_i32_0 : i32, i32, i32
  }
  func.func @transform_1(%arg0: i32) -> (i32, i32) {
    %c0_i32 = arith.constant 0 : i32
    %c0_i32_0 = arith.constant 0 : i32
    %c0_i32_1 = arith.constant 0 : i32
    return %c0_i32, %c0_i32_0 : i32, i32
  }
  func.func @transform_2(%arg0: i32) -> (i32, i32) {
    %c0_i32 = arith.constant 0 : i32
    %c0_i32_0 = arith.constant 0 : i32
    %c0_i32_1 = arith.constant 0 : i32
    return %c0_i32, %c0_i32_0 : i32, i32
  }
  func.func @transform_3(%arg0: i32) -> (i32, i32) {
    %c0_i32 = arith.constant 0 : i32
    %c0_i32_0 = arith.constant 0 : i32
    return %c0_i32, %arg0 : i32, i32
  }
}

</mosaic_0001>

<llo_original>
// kernel: tpu_custom_call.1
$region0: #{tpu_custom_call.1}
  #allocation0 [shape = 'u32[]', space=smem, size = 0x4, offset = 0x4, fixed_abs, tag = 'smem constant byte address 0x4 - core index']
  #allocation1 [shape = 'u32[144,128]{1,0:T(1,128)}', space=vmem, size = 0x12000, scoped, tag = 'internal scratch']
  %s0 = inlined_call_operand.vmem [shape: f32[2,16,32], index: 0, kind: input, shape index: {}]
  %s1 = inlined_call_operand.vmem [shape: bf16[481,32], index: 1, kind: input, shape index: {}]
  %s2 = inlined_call_operand.vmem [shape: bf16[33,4], index: 2, kind: input, shape index: {}]
  %s3 = inlined_call_operand.hbm [shape: f32[2,32], index: 3, kind: output, shape index: {}]
  %s4 = sld [smem:[#allocation0]]
  $region22: #{tpu_custom_call.1} parent=0
    _
  %s6 = ssub.s32 1, %s4
  %s7 = scalar_select 0, %s6, %s4
  $region1: #{tpu_custom_call.1} parent=0
    #allocation2 [shape = 'u8[1024]{0}', space=vmem, size = 0x400, scoped, tag = 'output window, operand 0, single buffered']
    #allocation3 [shape = 's32[1]{0}', space=sflag, size = 0x4, scoped, tag = 'scoped memory for tpu_custom_call.1']
    %8 = vsyncpa [#allocation3], 0
    // Predicated region
    $region2: #{tpu_custom_call.1} parent=1 // pred_check
      _
    $region3: #{tpu_custom_call.1} parent=1 // pred_check_branch
      %10 = sbr.rel (0) target = $region5
    $region4: #{tpu_custom_call.1} parent=1 // pred_region
      _
    $region5: #{tpu_custom_call.1} parent=1 // pred_fallthru
      _
    // Predicated region
    $region6: #{tpu_custom_call.1} parent=1 // pred_check
      _
    $region7: #{tpu_custom_call.1} parent=1 // pred_check_branch
      %12 = sbr.rel (0) target = $region9
    $region8: #{tpu_custom_call.1} parent=1 // pred_region
      _
    $region9: #{tpu_custom_call.1} parent=1 // pred_fallthru
      _
    // Predicated region
    $region10: #{tpu_custom_call.1} parent=1 // pred_check
      _
    $region11: #{tpu_custom_call.1} parent=1 // pred_check_branch
      %14 = sbr.rel (0) target = $region13
    $region12: #{tpu_custom_call.1} parent=1 // pred_region
      _
    $region13: #{tpu_custom_call.1} parent=1 // pred_fallthru
      _
    %v17 = vld [vmem:[%s0] sm:$0xff]
    %v18 = vld [vmem:[%s0 + $0x8] sm:$0xff]
    %v19 = vld [vmem:[%s0 + $0x10] sm:$0xff]
    %v20 = vld [vmem:[%s0 + $0x18] sm:$0xff]
    %v21 = vpack.c.bf16 %v18, %v17
    %v22 = vpack.c.bf16 %v20, %v19
    %v24 = vshrl.u32 %v21, 16
    %v26 = vrot.slane %v24, 4
    %v27 = vshll.u32 %v21, 16
    %v29 = vrot.slane %v27, 5
    %v30 = vor.u32 %v26, %v29
    %v32 = vshrl.u32 %v22, 16
    %v34 = vrot.slane %v32, 4
    %v35 = vshll.u32 %v22, 16
    %v37 = vrot.slane %v35, 5
    %v38 = vor.u32 %v34, %v37
    %vm41 = vcmask 1043456
    %vm42 = vsmask.f32 3328
    %vm43 = vmand %vm41, %vm42
    %v44 = vsel %vm43, 0, %v30
    %v45 = vsel %vm43, 0, %v38
    %v46 = vsel %vm43, %v30, 0
    %v47 = vsel %vm43, %v38, 0
    %vm48 = vsmask.f32 7424
    %v50 = vshrl.u32 %v44, 16
    %v52 = vshll.u32 %v44, 16
    %v54 = vrot.slane %v52, 1
    %v55 = vor.u32 %v50, %v54
    %v57 = vshll.u32 %v46, 16
    %v59 = vrot.slane %v57, 1
    %v60 = vsel %vm48, %v55, %v59
    %v62 = vshrl.u32 %v45, 16
    %v64 = vshll.u32 %v45, 16
    %v66 = vrot.slane %v64, 1
    %v67 = vor.u32 %v62, %v66
    %v69 = vshll.u32 %v47, 16
    %v71 = vrot.slane %v69, 1
    %v72 = vsel %vm48, %v67, %v71
    %73 = vrot.lane.b32.xlu0 %v60, 32
    %v74 = vpop.permute.xlu0 %73
    %75 = vrot.lane.b32.xlu0 %v72, 32
    %v76 = vpop.permute.xlu0 %75
    %vm81 = vcmask 1046528
    %v82 = vrot.slane %v44, 1
    %v83 = vrot.slane %v46, 1
    %v84 = vsel %vm81, %v82, %v83
    %v85 = vrot.slane %v45, 1
    %v86 = vrot.slane %v47, 1
    %v87 = vsel %vm81, %v85, %v86
    %88 = vrot.lane.b32.xlu0 %v84, 64
    %v89 = vpop.permute.xlu0 %88
    %90 = vrot.lane.b32.xlu0 %v87, 64
    %v91 = vpop.permute.xlu0 %90
    %vm92 = vsmask.f32 6400
    %v93 = vrot.slane %v50, 1
    %v94 = vrot.slane %v52, 2
    %v95 = vor.u32 %v93, %v94
    %v96 = vshrl.u32 %v46, 16
    %v98 = vrot.slane %v96, 1
    %v99 = vrot.slane %v57, 2
    %v100 = vor.u32 %v98, %v99
    %v101 = vsel %vm92, %v95, %v100
    %v102 = vrot.slane %v62, 1
    %v103 = vrot.slane %v64, 2
    %v104 = vor.u32 %v102, %v103
    %v105 = vshrl.u32 %v47, 16
    %v107 = vrot.slane %v105, 1
    %v108 = vrot.slane %v69, 2
    %v109 = vor.u32 %v107, %v108
    %v110 = vsel %vm92, %v104, %v109
    %111 = vrot.lane.b32.xlu0 %v101, 96
    %v112 = vpop.permute.xlu0 %111
    %113 = vrot.lane.b32.xlu0 %v110, 96
    %v114 = vpop.permute.xlu0 %113
    %vm115 = vcmask 1045504
    %v116 = vrot.slane %v44, 2
    %v117 = vrot.slane %v46, 2
    %v118 = vsel %vm115, %v116, %v117
    %v119 = vrot.slane %v45, 2
    %v120 = vrot.slane %v47, 2
    %v121 = vsel %vm115, %v119, %v120
    %vm122 = vsmask.f32 5376
    %v123 = vrot.slane %v50, 2
    %v124 = vrot.slane %v52, 3
    %v125 = vor.u32 %v123, %v124
    %v126 = vrot.slane %v96, 2
    %v127 = vrot.slane %v57, 3
    %v128 = vor.u32 %v126, %v127
    %v129 = vsel %vm122, %v125, %v128
    %v130 = vrot.slane %v62, 2
    %v131 = vrot.slane %v64, 3
    %v132 = vor.u32 %v130, %v131
    %v133 = vrot.slane %v105, 2
    %v134 = vrot.slane %v69, 3
    %v135 = vor.u32 %v133, %v134
    %v136 = vsel %vm122, %v132, %v135
    %137 = vrot.lane.b32.xlu0 %v129, 32
    %v138 = vpop.permute.xlu0 %137
    %139 = vrot.lane.b32.xlu0 %v136, 32
    %v140 = vpop.permute.xlu0 %139
    %vm141 = vcmask 1044480
    %v142 = vrot.slane %v44, 3
    %v143 = vrot.slane %v46, 3
    %v144 = vsel %vm141, %v142, %v143
    %v145 = vrot.slane %v45, 3
    %v146 = vrot.slane %v47, 3
    %v147 = vsel %vm141, %v145, %v146
    %148 = vrot.lane.b32.xlu0 %v144, 64
    %v149 = vpop.permute.xlu0 %148
    %150 = vrot.lane.b32.xlu0 %v147, 64
    %v151 = vpop.permute.xlu0 %150
    %vm152 = vsmask.f32 4352
    %v153 = vrot.slane %v50, 3
    %v154 = vrot.slane %v52, 4
    %v155 = vor.u32 %v153, %v154
    %v156 = vrot.slane %v96, 3
    %v157 = vrot.slane %v57, 4
    %v158 = vor.u32 %v156, %v157
    %v159 = vsel %vm152, %v155, %v158
    %v160 = vrot.slane %v62, 3
    %v161 = vrot.slane %v64, 4
    %v162 = vor.u32 %v160, %v161
    %v163 = vrot.slane %v105, 3
    %v164 = vrot.slane %v69, 4
    %v165 = vor.u32 %v163, %v164
    %v166 = vsel %vm152, %v162, %v165
    %167 = vrot.lane.b32.xlu0 %v159, 96
    %v168 = vpop.permute.xlu0 %167
    %169 = vrot.lane.b32.xlu0 %v166, 96
    %v170 = vpop.permute.xlu0 %169
    %v171 = vrot.slane %v44, 4
    %v172 = vrot.slane %v46, 4
    %v173 = vsel %vm41, %v171, %v172
    %v174 = vrot.slane %v45, 4
    %v175 = vrot.slane %v47, 4
    %v176 = vsel %vm41, %v174, %v175
    %v177 = vrot.slane %v50, 4
    %v178 = vrot.slane %v52, 5
    %v179 = vor.u32 %v177, %v178
    %v180 = vrot.slane %v96, 4
    %v181 = vrot.slane %v57, 5
    %v182 = vor.u32 %v180, %v181
    %v183 = vsel %vm42, %v179, %v182
    %v184 = vrot.slane %v62, 4
    %v185 = vrot.slane %v64, 5
    %v186 = vor.u32 %v184, %v185
    %v187 = vrot.slane %v105, 4
    %v188 = vrot.slane %v69, 5
    %v189 = vor.u32 %v187, %v188
    %v190 = vsel %vm42, %v186, %v189
    %191 = vrot.lane.b32.xlu0 %v183, 32
    %v192 = vpop.permute.xlu0 %191
    %193 = vrot.lane.b32.xlu0 %v190, 32
    %v194 = vpop.permute.xlu0 %193
    %vm195 = vcmask 1042432
    %v196 = vrot.slane %v44, 5
    %v197 = vrot.slane %v46, 5
    %v198 = vsel %vm195, %v196, %v197
    %v199 = vrot.slane %v45, 5
    %v200 = vrot.slane %v47, 5
    %v201 = vsel %vm195, %v199, %v200
    %202 = vrot.lane.b32.xlu0 %v198, 64
    %v203 = vpop.permute.xlu0 %202
    %204 = vrot.lane.b32.xlu0 %v201, 64
    %v205 = vpop.permute.xlu0 %204
    %vm206 = vsmask.f32 2304
    %v207 = vrot.slane %v50, 5
    %v208 = vrot.slane %v52, 6
    %v209 = vor.u32 %v207, %v208
    %v210 = vrot.slane %v96, 5
    %v211 = vrot.slane %v57, 6
    %v212 = vor.u32 %v210, %v211
    %v213 = vsel %vm206, %v209, %v212
    %v214 = vrot.slane %v62, 5
    %v215 = vrot.slane %v64, 6
    %v216 = vor.u32 %v214, %v215
    %v217 = vrot.slane %v105, 5
    %v218 = vrot.slane %v69, 6
    %v219 = vor.u32 %v217, %v218
    %v220 = vsel %vm206, %v216, %v219
    %221 = vrot.lane.b32.xlu0 %v213, 96
    %v222 = vpop.permute.xlu0 %221
    %223 = vrot.lane.b32.xlu0 %v220, 96
    %v224 = vpop.permute.xlu0 %223
    %vm225 = vcmask 1041408
    %v226 = vrot.slane %v44, 6
    %v227 = vrot.slane %v46, 6
    %v228 = vsel %vm225, %v226, %v227
    %v229 = vrot.slane %v45, 6
    %v230 = vrot.slane %v47, 6
    %v231 = vsel %vm225, %v229, %v230
    %vm232 = vsmask.f32 1280
    %v233 = vrot.slane %v50, 6
    %v234 = vrot.slane %v52, 7
    %v235 = vor.u32 %v233, %v234
    %v236 = vrot.slane %v96, 6
    %v237 = vrot.slane %v57, 7
    %v238 = vor.u32 %v236, %v237
    %v239 = vsel %vm232, %v235, %v238
    %v240 = vrot.slane %v62, 6
    %v241 = vrot.slane %v64, 7
    %v242 = vor.u32 %v240, %v241
    %v243 = vrot.slane %v105, 6
    %v244 = vrot.slane %v69, 7
    %v245 = vor.u32 %v243, %v244
    %v246 = vsel %vm232, %v242, %v245
    %247 = vrot.lane.b32.xlu0 %v239, 32
    %v248 = vpop.permute.xlu0 %247
    %249 = vrot.lane.b32.xlu0 %v246, 32
    %v250 = vpop.permute.xlu0 %249
    %vm251 = vcmask 1040384
    %v252 = vrot.slane %v44, 7
    %v253 = vrot.slane %v46, 7
    %v254 = vsel %vm251, %v252, %v253
    %v255 = vrot.slane %v45, 7
    %v256 = vrot.slane %v47, 7
    %v257 = vsel %vm251, %v255, %v256
    %258 = vrot.lane.b32.xlu0 %v254, 64
    %v259 = vpop.permute.xlu0 %258
    %260 = vrot.lane.b32.xlu0 %v257, 64
    %v261 = vpop.permute.xlu0 %260
    %vm262 = vcmask 261120
    %v264 = vsel %vm262, %v44, %v74
    %v266 = vsel %vm262, %v45, %v76
    %vm267 = vcmask 523264
    %v269 = vsel %vm267, %v264, %v89
    %v271 = vsel %vm267, %v266, %v91
    %vm272 = vcmask 785408
    %v274 = vsel %vm272, %v269, %v112
    %v277 = vsel %vm272, %v271, %v114
    %v281 = vsel %vm262, %v118, %v138
    %v284 = vsel %vm262, %v121, %v140
    %v286 = vsel %vm267, %v281, %v149
    %v288 = vsel %vm267, %v284, %v151
    %v290 = vsel %vm272, %v286, %v168
    %v293 = vsel %vm272, %v288, %v170
    %v297 = vsel %vm262, %v173, %v192
    %v300 = vsel %vm262, %v176, %v194
    %v302 = vsel %vm267, %v297, %v203
    %v304 = vsel %vm267, %v300, %v205
    %v306 = vsel %vm272, %v302, %v222
    %v309 = vsel %vm272, %v304, %v224
    %v313 = vsel %vm262, %v228, %v248
    %v316 = vsel %vm262, %v231, %v250
    %v318 = vsel %vm267, %v313, %v259
    %v320 = vsel %vm267, %v316, %v261
    %v322 = vsel %vm272, %v318, 1065369472
    %v323 = vsel %vm272, %v320, 1065369472
    %v324 = vld [vmem:[%s1] sm:$0xf]
    %v325 = vld [vmem:[%s1 + $0x4] sm:$0xf]
    %v326 = vld [vmem:[%s1 + $0x8] sm:$0xf]
    %v327 = vld [vmem:[%s1 + $0xc] sm:$0xf]
    %v328 = vld [vmem:[%s1 + $0x10] sm:$0xf]
    %v329 = vld [vmem:[%s1 + $0x14] sm:$0xf]
    %v330 = vld [vmem:[%s1 + $0x18] sm:$0xf]
    %v331 = vld [vmem:[%s1 + $0x1c] sm:$0xf]
    %v332 = vld [vmem:[%s1 + $0x20] sm:$0xf]
    %v333 = vld [vmem:[%s1 + $0x24] sm:$0xf]
    %v334 = vld [vmem:[%s1 + $0x28] sm:$0xf]
    %v335 = vld [vmem:[%s1 + $0x2c] sm:$0xf]
    %v336 = vld [vmem:[%s1 + $0x30] sm:$0xf]
    %v337 = vld [vmem:[%s1 + $0x34] sm:$0xf]
    %v338 = vld [vmem:[%s1 + $0x38] sm:$0xf]
    %v339 = vld [vmem:[%s1 + $0x3c] sm:$0xf]
    %v340 = vld [vmem:[%s1 + $0x40] sm:$0xf]
    %v341 = vld [vmem:[%s1 + $0x44] sm:$0xf]
    %v342 = vld [vmem:[%s1 + $0x48] sm:$0xf]
    %v343 = vld [vmem:[%s1 + $0x4c] sm:$0xf]
    %v344 = vld [vmem:[%s1 + $0x50] sm:$0xf]
    %v345 = vld [vmem:[%s1 + $0x54] sm:$0xf]
    %v346 = vld [vmem:[%s1 + $0x58] sm:$0xf]
    %v347 = vld [vmem:[%s1 + $0x5c] sm:$0xf]
    %v348 = vld [vmem:[%s1 + $0x60] sm:$0xf]
    %v349 = vld [vmem:[%s1 + $0x64] sm:$0xf]
    %v350 = vld [vmem:[%s1 + $0x68] sm:$0xf]
    %v351 = vld [vmem:[%s1 + $0x6c] sm:$0xf]
    %v352 = vld [vmem:[%s1 + $0x70] sm:$0xf]
    %v353 = vld [vmem:[%s1 + $0x74] sm:$0xf]
    %v354 = vld [vmem:[%s1 + $0x78] sm:$0xf]
    %v355 = vld [vmem:[%s1 + $0x7c] sm:$0xf]
    %v356 = vld [vmem:[%s1 + $0x80] sm:$0xf]
    %v357 = vld [vmem:[%s1 + $0x84] sm:$0xf]
    %v358 = vld [vmem:[%s1 + $0x88] sm:$0xf]
    %v359 = vld [vmem:[%s1 + $0x8c] sm:$0xf]
    %v360 = vld [vmem:[%s1 + $0x90] sm:$0xf]
    %v361 = vld [vmem:[%s1 + $0x94] sm:$0xf]
    %v362 = vld [vmem:[%s1 + $0x98] sm:$0xf]
    %v363 = vld [vmem:[%s1 + $0x9c] sm:$0xf]
    %v364 = vld [vmem:[%s1 + $0xa0] sm:$0xf]
    %v365 = vld [vmem:[%s1 + $0xa4] sm:$0xf]
    %v366 = vld [vmem:[%s1 + $0xa8] sm:$0xf]
    %v367 = vld [vmem:[%s1 + $0xac] sm:$0xf]
    %v368 = vld [vmem:[%s1 + $0xb0] sm:$0xf]
    %v369 = vld [vmem:[%s1 + $0xb4] sm:$0xf]
    %v370 = vld [vmem:[%s1 + $0xb8] sm:$0xf]
    %v371 = vld [vmem:[%s1 + $0xbc] sm:$0xf]
    %v372 = vld [vmem:[%s1 + $0xc0] sm:$0xf]
    %v373 = vld [vmem:[%s1 + $0xc4] sm:$0xf]
    %v374 = vld [vmem:[%s1 + $0xc8] sm:$0xf]
    %v375 = vld [vmem:[%s1 + $0xcc] sm:$0xf]
    %v376 = vld [vmem:[%s1 + $0xd0] sm:$0xf]
    %v377 = vld [vmem:[%s1 + $0xd4] sm:$0xf]
    %v378 = vld [vmem:[%s1 + $0xd8] sm:$0xf]
    %v379 = vld [vmem:[%s1 + $0xdc] sm:$0xf]
    %v380 = vld [vmem:[%s1 + $0xe0] sm:$0xf]
    %v381 = vld [vmem:[%s1 + $0xe4] sm:$0xf]
    %v382 = vld [vmem:[%s1 + $0xe8] sm:$0xf]
    %v383 = vld [vmem:[%s1 + $0xec] sm:$0xf]
    %v384 = vld [vmem:[%s1 + $0xf0] sm:$0x1]
    %v446 = vunpack.c.l.b16 %v324
    %v447 = vunpack.c.l.b16 %v325
    %v448 = vunpack.c.l.b16 %v326
    %v449 = vunpack.c.l.b16 %v327
    %v450 = vunpack.c.l.b16 %v328
    %v451 = vunpack.c.l.b16 %v329
    %v452 = vunpack.c.l.b16 %v330
    %v453 = vunpack.c.l.b16 %v331
    %v454 = vunpack.c.l.b16 %v332
    %v455 = vunpack.c.l.b16 %v333
    %v456 = vunpack.c.l.b16 %v334
    %v457 = vunpack.c.l.b16 %v335
    %v458 = vunpack.c.l.b16 %v336
    %v459 = vunpack.c.l.b16 %v337
    %v460 = vunpack.c.l.b16 %v338
    %v461 = vunpack.c.l.b16 %v339
    %v462 = vunpack.c.l.b16 %v340
    %v463 = vunpack.c.l.b16 %v341
    %v464 = vunpack.c.l.b16 %v342
    %v465 = vunpack.c.l.b16 %v343
    %v466 = vunpack.c.l.b16 %v344
    %v467 = vunpack.c.l.b16 %v345
    %v468 = vunpack.c.l.b16 %v346
    %v469 = vunpack.c.l.b16 %v347
    %v470 = vunpack.c.l.b16 %v348
    %v471 = vunpack.c.l.b16 %v349
    %v472 = vunpack.c.l.b16 %v350
    %v473 = vunpack.c.l.b16 %v351
    %v474 = vunpack.c.l.b16 %v352
    %v475 = vunpack.c.l.b16 %v353
    %v476 = vunpack.c.l.b16 %v354
    %v477 = vunpack.c.l.b16 %v355
    %v478 = vunpack.c.l.b16 %v356
    %v479 = vunpack.c.l.b16 %v357
    %v480 = vunpack.c.l.b16 %v358
    %v481 = vunpack.c.l.b16 %v359
    %v482 = vunpack.c.l.b16 %v360
    %v483 = vunpack.c.l.b16 %v361
    %v484 = vunpack.c.l.b16 %v362
    %v485 = vunpack.c.l.b16 %v363
    %v486 = vunpack.c.l.b16 %v364
    %v487 = vunpack.c.l.b16 %v365
    %v488 = vunpack.c.l.b16 %v366
    %v489 = vunpack.c.l.b16 %v367
    %v490 = vunpack.c.l.b16 %v368
    %v491 = vunpack.c.l.b16 %v369
    %v492 = vunpack.c.l.b16 %v370
    %v493 = vunpack.c.l.b16 %v371
    %v494 = vunpack.c.l.b16 %v372
    %v495 = vunpack.c.l.b16 %v373
    %v496 = vunpack.c.l.b16 %v374
    %v497 = vunpack.c.l.b16 %v375
    %v498 = vunpack.c.l.b16 %v376
    %v499 = vunpack.c.l.b16 %v377
    %v500 = vunpack.c.l.b16 %v378
    %v501 = vunpack.c.l.b16 %v379
    %v502 = vunpack.c.l.b16 %v380
    %v503 = vunpack.c.l.b16 %v381
    %v504 = vunpack.c.l.b16 %v382
    %v505 = vunpack.c.l.b16 %v383
    %v506 = vunpack.c.l.b16 %v384
    %v507 = vpack.c.b16 %v447, %v446
    %v508 = vpack.c.b16 %v449, %v448
    %v509 = vpack.c.b16 %v451, %v450
    %v510 = vpack.c.b16 %v453, %v452
    %v511 = vpack.c.b16 %v455, %v454
    %v512 = vpack.c.b16 %v457, %v456
    %v513 = vpack.c.b16 %v459, %v458
    %v514 = vpack.c.b16 %v461, %v460
    %v515 = vpack.c.b16 %v463, %v462
    %v516 = vpack.c.b16 %v465, %v464
    %v517 = vpack.c.b16 %v467, %v466
    %v518 = vpack.c.b16 %v469, %v468
    %v519 = vpack.c.b16 %v471, %v470
    %v520 = vpack.c.b16 %v473, %v472
    %v521 = vpack.c.b16 %v475, %v474
    %v522 = vpack.c.b16 %v477, %v476
    %v523 = vpack.c.b16 %v479, %v478
    %v524 = vpack.c.b16 %v481, %v480
    %v525 = vpack.c.b16 %v483, %v482
    %v526 = vpack.c.b16 %v485, %v484
    %v527 = vpack.c.b16 %v487, %v486
    %v528 = vpack.c.b16 %v489, %v488
    %v529 = vpack.c.b16 %v491, %v490
    %v530 = vpack.c.b16 %v493, %v492
    %v531 = vpack.c.b16 %v495, %v494
    %v532 = vpack.c.b16 %v497, %v496
    %v533 = vpack.c.b16 %v499, %v498
    %v534 = vpack.c.b16 %v501, %v500
    %v535 = vpack.c.b16 %v503, %v502
    %v536 = vpack.c.b16 %v505, %v504
    %v537 = vpack.c.b16 %v506, %v506
    %vm568 = vcmask 793600
    %v569 = vsel %vm568, %v322, 0
    %v571 = vsel %vm568, %v323, 0
    %vm573 = vcmask 1040384
    %v574 = vsel 0, 4294967295, 65535
    %v575 = vsel %vm573, %v574, 0
    %v577 = vand.u32 %v537, %v575
    %579 = vmatprep.subr.bf16.mxu0 0
    %580 = vmatpush1.bf16.msra.mxu0 %v514
    %581 = vmatprep.subr.bf16.mxu0 0
    %582 = vmatpush1.bf16.msra.mxu0 %v513
    %583 = vmatprep.subr.bf16.mxu0 0
    %584 = vmatpush1.bf16.msra.mxu0 %v512
    %585 = vmatprep.subr.bf16.mxu0 0
    %586 = vmatpush1.bf16.msra.mxu0 %v511
    %587 = vmatprep.subr.bf16.mxu0 0
    %588 = vmatpush1.bf16.msra.mxu0 %v510
    %589 = vmatprep.subr.bf16.mxu0 0
    %590 = vmatpush1.bf16.msra.mxu0 %v509
    %591 = vmatprep.subr.bf16.mxu0 0
    %592 = vmatpush1.bf16.msra.mxu0 %v508
    %593 = vmatprep.subr.bf16.mxu0 0
    %594 = vmatpush1.bf16.msra.mxu0 %v507
    %595 = vmatprep.subr.bf16.mxu0 0
    %596 = vmatpush2.bf16.msra.mxu0 %v522
    %597 = vmatprep.subr.bf16.mxu0 0
    %598 = vmatpush2.bf16.msra.mxu0 %v521
    %599 = vmatprep.subr.bf16.mxu0 0
    %600 = vmatpush2.bf16.msra.mxu0 %v520
    %601 = vmatprep.subr.bf16.mxu0 0
    %602 = vmatpush2.bf16.msra.mxu0 %v519
    %603 = vmatprep.subr.bf16.mxu0 0
    %604 = vmatpush2.bf16.msra.mxu0 %v518
    %605 = vmatprep.subr.bf16.mxu0 0
    %606 = vmatpush2.bf16.msra.mxu0 %v517
    %607 = vmatprep.subr.bf16.mxu0 0
    %608 = vmatpush2.bf16.msra.mxu0 %v516
    %609 = vmatprep.subr.bf16.mxu0 0
    %610 = vmatpush2.bf16.msra.mxu0 %v515
    %611 = vmatprep.mubr.bf16.mxu0 %v290
    %612 = vmatmul.mubr.bf16.gmra.mxu0 %v274
    %v613 = vpop.f32.mrf.mxu0
    %v614 = vadd.f32 0.0, %v613
    %v615 = vpop.f32.mrf.mxu0
    %v616 = vpop.f32.mrf.mxu0
    %v617 = vadd.f32 0.0, %v616
    %v618 = vpop.f32.mrf.mxu0
    %619 = vmatprep.mubr.bf16.mxu0 %v293
    %620 = vmatmul.mubr.bf16.gmra.mxu0 %v277
    %v621 = vpop.f32.mrf.mxu0
    %v622 = vadd.f32 0.0, %v621
    %v623 = vpop.f32.mrf.mxu0
    %v624 = vpop.f32.mrf.mxu0
    %v625 = vadd.f32 0.0, %v624
    %v626 = vpop.f32.mrf.mxu0
    %627 = vdwg.mxu0
    %628 = vmatprep.subr.bf16.mxu0 0
    %629 = vmatpush1.bf16.msra.mxu0 %v530
    %630 = vmatprep.subr.bf16.mxu0 0
    %631 = vmatpush1.bf16.msra.mxu0 %v529
    %632 = vmatprep.subr.bf16.mxu0 0
    %633 = vmatpush1.bf16.msra.mxu0 %v528
    %634 = vmatprep.subr.bf16.mxu0 0
    %635 = vmatpush1.bf16.msra.mxu0 %v527
    %636 = vmatprep.subr.bf16.mxu0 0
    %637 = vmatpush1.bf16.msra.mxu0 %v526
    %638 = vmatprep.subr.bf16.mxu0 0
    %639 = vmatpush1.bf16.msra.mxu0 %v525
    %640 = vmatprep.subr.bf16.mxu0 0
    %641 = vmatpush1.bf16.msra.mxu0 %v524
    %642 = vmatprep.subr.bf16.mxu0 0
    %643 = vmatpush1.bf16.msra.mxu0 %v523
    %644 = vmatprep.subr.bf16.mxu0 0
    %645 = vmatpush2.bf16.msra.mxu0 0
    %646 = vmatprep.subr.bf16.mxu0 0
    %647 = vmatpush2.bf16.msra.mxu0 %v577
    %648 = vmatprep.subr.bf16.mxu0 0
    %649 = vmatpush2.bf16.msra.mxu0 %v536
    %650 = vmatprep.subr.bf16.mxu0 0
    %651 = vmatpush2.bf16.msra.mxu0 %v535
    %652 = vmatprep.subr.bf16.mxu0 0
    %653 = vmatpush2.bf16.msra.mxu0 %v534
    %654 = vmatprep.subr.bf16.mxu0 0
    %655 = vmatpush2.bf16.msra.mxu0 %v533
    %656 = vmatprep.subr.bf16.mxu0 0
    %657 = vmatpush2.bf16.msra.mxu0 %v532
    %658 = vmatprep.subr.bf16.mxu0 0
    %659 = vmatpush2.bf16.msra.mxu0 %v531
    %660 = vmatprep.mubr.bf16.mxu0 %v569
    %661 = vmatmul.mubr.bf16.gmra.mxu0 %v306
    %v662 = vpop.f32.mrf.mxu0
    %v663 = vadd.f32 %v614, %v662
    %v664 = vpop.f32.mrf.mxu0
    %v665 = vpop.f32.mrf.mxu0
    %v666 = vadd.f32 %v617, %v665
    %v667 = vpop.f32.mrf.mxu0
    %668 = vmatprep.mubr.bf16.mxu0 %v571
    %669 = vmatmul.mubr.bf16.gmra.mxu0 %v309
    %v670 = vpop.f32.mrf.mxu0
    %v671 = vadd.f32 %v622, %v670
    %v672 = vpop.f32.mrf.mxu0
    %v673 = vpop.f32.mrf.mxu0
    %v674 = vadd.f32 %v625, %v673
    %v675 = vpop.f32.mrf.mxu0
    %676 = vdwg.mxu0
    %vm677 = vcmp.gt.f32.partialorder %v663, 0.0
    %vm678 = vcmp.gt.f32.partialorder %v666, 0.0
    %vm679 = vcmp.gt.f32.partialorder %v671, 0.0
    %vm680 = vcmp.gt.f32.partialorder %v674, 0.0
    %v681 = vmul.f32 %v663, 1.442695
    %v682 = vpow.pop %v681
    %v683 = vmul.f32 %v666, 1.442695
    %v684 = vpow.pop %v683
    %v685 = vmul.f32 %v671, 1.442695
    %v686 = vpow.pop %v685
    %v687 = vmul.f32 %v674, 1.442695
    %v688 = vpow.pop %v687
    %v689 = vsub.f32 %v682, 1.0
    %v690 = vsub.f32 %v684, 1.0
    %v691 = vsub.f32 %v686, 1.0
    %v692 = vsub.f32 %v688, 1.0
    %v693 = vsel %vm677, %v663, %v689
    %v694 = vsel %vm678, %v666, %v690
    %v695 = vsel %vm679, %v671, %v691
    %v696 = vsel %vm680, %v674, %v692
    %v697 = vpack.c.bf16 %v694, %v693
    %v698 = vpack.c.bf16 %v696, %v695
    %v700 = vsel %vm262, %v697, 1065369472
    %v702 = vsel %vm262, %v698, 1065369472
    %v703 = vld [vmem:[%s2] sm:$0xf]
    %v704 = vld [vmem:[%s2 + $0x4] sm:$0xf]
    %v705 = vld [vmem:[%s2 + $0x8] sm:$0xf]
    %v706 = vld [vmem:[%s2 + $0xc] sm:$0xf]
    %v707 = vld [vmem:[%s2 + $0x10] sm:$0x1]
    %v713 = vunpack.c.l.b16 %v703
    %v714 = vunpack.c.l.b16 %v704
    %v715 = vunpack.c.l.b16 %v705
    %v716 = vunpack.c.l.b16 %v706
    %v717 = vunpack.c.l.b16 %v707
    %v718 = vpack.c.b16 %v714, %v713
    %v719 = vpack.c.b16 %v716, %v715
    %v720 = vpack.c.b16 %v717, %v717
    %vm723 = vcmask 269312
    %v724 = vsel %vm723, %v700, 0
    %v726 = vsel %vm723, %v702, 0
    %v729 = vand.u32 %v720, %v575
    %731 = vmatprep.subr.bf16.mxu0 0
    %732 = vmatpush1.bf16.msra.mxu0 0
    %733 = vmatprep.subr.bf16.mxu0 0
    %734 = vmatpush1.bf16.msra.mxu0 0
    %735 = vmatprep.subr.bf16.mxu0 0
    %736 = vmatpush1.bf16.msra.mxu0 0
    %737 = vmatprep.subr.bf16.mxu0 0
    %738 = vmatpush1.bf16.msra.mxu0 0
    %739 = vmatprep.subr.bf16.mxu0 0
    %740 = vmatpush1.bf16.msra.mxu0 0
    %741 = vmatprep.subr.bf16.mxu0 0
    %742 = vmatpush1.bf16.msra.mxu0 %v729
    %743 = vmatprep.subr.bf16.mxu0 0
    %744 = vmatpush1.bf16.msra.mxu0 %v719
    %745 = vmatprep.subr.bf16.mxu0 0
    %746 = vmatpush1.bf16.msra.mxu0 %v718
    %747 = vmatprep.subr.bf16.mxu0 0
    %748 = vmatpush2.bf16.msra.mxu0 0
    %749 = vmatprep.subr.bf16.mxu0 0
    %750 = vmatpush2.bf16.msra.mxu0 0
    %751 = vmatprep.subr.bf16.mxu0 0
    %752 = vmatpush2.bf16.msra.mxu0 0
    %753 = vmatprep.subr.bf16.mxu0 0
    %754 = vmatpush2.bf16.msra.mxu0 0
    %755 = vmatprep.subr.bf16.mxu0 0
    %756 = vmatpush2.bf16.msra.mxu0 0
    %757 = vmatprep.subr.bf16.mxu0 0
    %758 = vmatpush2.bf16.msra.mxu0 0
    %759 = vmatprep.subr.bf16.mxu0 0
    %760 = vmatpush2.bf16.msra.mxu0 0
    %761 = vmatprep.subr.bf16.mxu0 0
    %762 = vmatpush2.bf16.msra.mxu0 0
    %763 = vmatprep.mubr.bf16.mxu0 0
    %764 = vmatmul.mubr.bf16.gmra.mxu0 %v724
    %v765 = vpop.f32.mrf.mxu0
    %v766 = vadd.f32 0.0, %v765
    %v767 = vpop.f32.mrf.mxu0
    %v768 = vpop.f32.mrf.mxu0
    %v769 = vadd.f32 0.0, %v768
    %v770 = vpop.f32.mrf.mxu0
    %771 = vmatprep.mubr.bf16.mxu0 0
    %772 = vmatmul.mubr.bf16.gmra.mxu0 %v726
    %v773 = vpop.f32.mrf.mxu0
    %v774 = vadd.f32 0.0, %v773
    %v775 = vpop.f32.mrf.mxu0
    %v776 = vpop.f32.mrf.mxu0
    %v777 = vadd.f32 0.0, %v776
    %v778 = vpop.f32.mrf.mxu0
    %779 = vdwg.mxu0
    %vm784 = vcmask 1046528
    %v785 = vrot.slane %v766, 1
    %v786 = vrot.slane %v769, 1
    %v787 = vsel %vm784, %v785, %v786
    %v788 = vrot.slane %v774, 1
    %v789 = vsel %vm784, %v786, %v788
    %v790 = vrot.slane %v777, 1
    %v791 = vsel %vm784, %v788, %v790
    %v794 = vsel %vm784, %v790, %v785
    %796 = vrot.lane.b32.xlu0 %v787, 126
    %v797 = vpop.permute.xlu0 %796
    %798 = vrot.lane.b32.xlu0 %v789, 126
    %v799 = vpop.permute.xlu0 %798
    %800 = vrot.lane.b32.xlu0 %v791, 126
    %v801 = vpop.permute.xlu0 %800
    %802 = vrot.lane.b32.xlu0 %v794, 126
    %v803 = vpop.permute.xlu0 %802
    %v808 = vadd.f32 %v766, %v797
    %v809 = vadd.f32 %v769, %v799
    %v810 = vadd.f32 %v774, %v801
    %v811 = vadd.f32 %v777, %v803
    %812 = vxpose.xlu0.b32.start [1/16] %v808, 128
    %813 = vxpose.xlu0.b32.cont [2/16] %v809, 128
    %814 = vxpose.xlu0.b32.cont [3/16] %v810, 128
    %815 = vxpose.xlu0.b32.cont [4/16] %v811, 128
    %816 = vxpose.xlu0.b32.cont [5/16] 0.0, 128
    %817 = vxpose.xlu0.b32.cont [6/16] 0.0, 128
    %818 = vxpose.xlu0.b32.cont [7/16] 0.0, 128
    %819 = vxpose.xlu0.b32.cont [8/16] 0.0, 128
    %820 = vxpose.xlu0.b32.cont [9/16] 0.0, 128
    %821 = vxpose.xlu0.b32.cont [10/16] 0.0, 128
    %822 = vxpose.xlu0.b32.cont [11/16] 0.0, 128
    %823 = vxpose.xlu0.b32.cont [12/16] 0.0, 128
    %824 = vxpose.xlu0.b32.cont [13/16] 0.0, 128
    %825 = vxpose.xlu0.b32.cont [14/16] 0.0, 128
    %826 = vxpose.xlu0.b32.cont [15/16] 0.0, 128
    %827 = vxpose.xlu0.b32.end [16/16] 0.0, 128
    %v828 = vpop.trf.xlu0
    %v829 = vpop.trf.xlu0
    %v830 = vpop.trf.xlu0
    %v831 = vpop.trf.xlu0
    %v832 = vpop.trf.xlu0
    %v833 = vpop.trf.xlu0
    %v834 = vpop.trf.xlu0
    %v835 = vpop.trf.xlu0
    %v836 = vpop.trf.xlu0
    %v837 = vpop.trf.xlu0
    %v838 = vpop.trf.xlu0
    %v839 = vpop.trf.xlu0
    %v840 = vpop.trf.xlu0
    %v841 = vpop.trf.xlu0
    %v842 = vpop.trf.xlu0
    %v843 = vpop.trf.xlu0
    %vm844 = vcmask 254976
    %845 = vst.msk [vmem:[#allocation2] sm:$0x3] %vm844, %v828
    // Predicated region
    $region14: #{tpu_custom_call.1} parent=1 // pred_check
      _
    $region15: #{tpu_custom_call.1} parent=1 // pred_check_branch
      %847 = sbr.rel (0) target = $region17
    $region16: #{tpu_custom_call.1} parent=1 // pred_region
      %s849 = ssub.s32 32, 32
      %850 = vsyncadd [#allocation3], %s849
      %s852 = sshll.u32 [#allocation2], 4
      %s853 = int_to_ptr.vmem [resolvable:$true] %s852
      %855 = dma.vmem_to_hbm [thread:$0]  %s853, 32, %s3, [#allocation3]
    $region17: #{tpu_custom_call.1} parent=1 // pred_fallthru
      _
    // Predicated region
    $region18: #{tpu_custom_call.1} parent=1 // pred_check
      _
    $region19: #{tpu_custom_call.1} parent=1 // pred_check_branch
      %857 = sbr.rel (0) target = $region21
    $region20: #{tpu_custom_call.1} parent=1 // pred_region
      %858 = dma.done [#allocation3], 32
    $region21: #{tpu_custom_call.1} parent=1 // pred_fallthru
      _
    %859 = vsyncpa [#allocation3], 1

</llo_original>
